<compile_context>
chip_gen: v5e
topology: v5e:2x2
jax: 0.10.0
libtpu: 0.0.40
codegen_flags: <defaults>
</compile_context>

<pallas_src>
import math
import functools

import jax
import jax.numpy as jnp
from jax.experimental import pallas as pl
from jax.experimental.pallas import tpu as pltpu


# ----------------------------------------------------------------------------
# helpers
# ----------------------------------------------------------------------------

_VMEM_LIMIT = 48 * 1024 * 1024  # fits under v7x's 64 MiB physical VMEM
_TILE_M = 256                   # row tile for activation slabs


def _cp(dims):
    return pltpu.CompilerParams(dimension_semantics=dims,
                                vmem_limit_bytes=_VMEM_LIMIT)


def _row_tile(M):
    return min(_TILE_M, M)


# ----------------------------------------------------------------------------
# Pallas kernels
# ----------------------------------------------------------------------------

def _linear_kernel(x_ref, w_ref, b_ref, o_ref):
    # x: (tm, K) f32, w: (K, N) bf16, b: (1, N) f32 -> o: (tm, N) f32
    o_ref[...] = jnp.dot(x_ref[...].astype(jnp.bfloat16), w_ref[...],
                         preferred_element_type=jnp.float32) + b_ref[...]


def _qkv_kernel(x_ref, wq_ref, wk_ref, wv_ref, bq_ref, bk_ref, bv_ref,
                q_ref, k_ref, v_ref):
    # fused Q/K/V projection: one activation read, three MXU matmuls
    x = x_ref[...].astype(jnp.bfloat16)
    q_ref[...] = jnp.dot(x, wq_ref[...], preferred_element_type=jnp.float32) + bq_ref[...]
    k_ref[...] = jnp.dot(x, wk_ref[...], preferred_element_type=jnp.float32) + bk_ref[...]
    v_ref[...] = jnp.dot(x, wv_ref[...], preferred_element_type=jnp.float32) + bv_ref[...]


def _kv_kernel(x_ref, wk_ref, wv_ref, bk_ref, bv_ref, k_ref, v_ref):
    x = x_ref[...].astype(jnp.bfloat16)
    k_ref[...] = jnp.dot(x, wk_ref[...], preferred_element_type=jnp.float32) + bk_ref[...]
    v_ref[...] = jnp.dot(x, wv_ref[...], preferred_element_type=jnp.float32) + bv_ref[...]


def _layernorm(z, g, b):
    mu = jnp.mean(z, axis=-1, keepdims=True)
    var = jnp.mean(jnp.square(z - mu), axis=-1, keepdims=True)
    return (z - mu) * jax.lax.rsqrt(var + 1e-5) * g + b


def _out_ln_kernel(ctx_ref, res_ref, w_ref, b_ref, g_ref, beta_ref, o_ref):
    # fused: attention output projection -> residual add -> LayerNorm
    h = jnp.dot(ctx_ref[...].astype(jnp.bfloat16), w_ref[...],
                preferred_element_type=jnp.float32) + b_ref[...]
    o_ref[...] = _layernorm(res_ref[...] + h, g_ref[...], beta_ref[...])


def _ffn_ln_kernel(x_ref, w1_ref, b1_ref, w2_ref, b2_ref, g_ref, beta_ref, o_ref):
    # fused: fc1 -> relu -> fc2 -> residual add -> LayerNorm
    x = x_ref[...]
    h = jnp.dot(x.astype(jnp.bfloat16), w1_ref[...],
                preferred_element_type=jnp.float32) + b1_ref[...]
    h = jnp.maximum(h, 0.0)
    y = jnp.dot(h.astype(jnp.bfloat16), w2_ref[...],
                preferred_element_type=jnp.float32) + b2_ref[...]
    o_ref[...] = _layernorm(x + y, g_ref[...], beta_ref[...])


def _mha_kernel(q_ref, k_ref, v_ref, m_ref, o_ref, *maybe_attn, n_heads, d_k):
    # one batch element per grid step; all heads handled in-kernel so the
    # Q/K/V/ctx lane dimension is d_model (not d_k).
    # q: (Lq, D) f32, k/v: (Lk, D) f32, m: (Lq, Lk) int8, o: (Lq, D) f32
    # TODO(synk): flash-style K-axis tiling + online softmax for long sequences
    #             (current kernel holds the full (Lq, Lk) scores per head).
    a_ref = maybe_attn[0] if maybe_attn else None
    q = (q_ref[...] * (1.0 / math.sqrt(d_k))).astype(jnp.bfloat16)  # fold scale into Q
    k = k_ref[...].astype(jnp.bfloat16)
    v = v_ref[...].astype(jnp.bfloat16)
    valid = m_ref[...] != 0                                         # (Lq, Lk) bool

    for h in range(n_heads):                                        # static unroll
        sl = slice(h * d_k, (h + 1) * d_k)
        s = jax.lax.dot_general(q[:, sl], k[:, sl],
                                (((1,), (1,)), ((), ())),
                                preferred_element_type=jnp.float32)  # (Lq, Lk)
        s = jnp.where(valid, s, -1e10)                               # masked_fill
        s = s - jnp.max(s, axis=-1, keepdims=True)
        p = jnp.exp(s)
        p = p * pl.reciprocal(jnp.sum(p, axis=-1, keepdims=True), approx=True)
        if a_ref is not None:
            a_ref[h] = p
        ctx = jnp.dot(p.astype(jnp.bfloat16), v[:, sl],
                      preferred_element_type=jnp.float32)            # (Lq, d_k)
        o_ref[:, sl] = ctx


# ----------------------------------------------------------------------------
# Pallas wrappers (row-tiled grids, "parallel" dimension semantics)
# ----------------------------------------------------------------------------
# TODO(synk): for large d_ff / vocab / d_model, additionally tile N and K with
#             a VMEM f32 accumulator and pl.when init/finalize.

def linear(x2d, w, b):
    M, K = x2d.shape
    N = w.shape[1]
    tm = _row_tile(M)
    return pl.pallas_call(
        _linear_kernel,
        out_shape=jax.ShapeDtypeStruct((M, N), jnp.float32),
        grid=(pl.cdiv(M, tm),),
        in_specs=[pl.BlockSpec((tm, K), lambda i: (i, 0)),
                  pl.BlockSpec((K, N), lambda i: (0, 0)),
                  pl.BlockSpec((1, N), lambda i: (0, 0))],
        out_specs=pl.BlockSpec((tm, N), lambda i: (i, 0)),
        compiler_params=_cp(("parallel",)),
    )(x2d, w, b)


def qkv_proj(x2d, wq, wk, wv, bq, bk, bv):
    M, K = x2d.shape
    N = wq.shape[1]
    tm = _row_tile(M)
    w_spec = pl.BlockSpec((K, N), lambda i: (0, 0))
    b_spec = pl.BlockSpec((1, N), lambda i: (0, 0))
    o_spec = pl.BlockSpec((tm, N), lambda i: (i, 0))
    return pl.pallas_call(
        _qkv_kernel,
        out_shape=(jax.ShapeDtypeStruct((M, N), jnp.float32),) * 3,
        grid=(pl.cdiv(M, tm),),
        in_specs=[pl.BlockSpec((tm, K), lambda i: (i, 0)),
                  w_spec, w_spec, w_spec, b_spec, b_spec, b_spec],
        out_specs=(o_spec, o_spec, o_spec),
        compiler_params=_cp(("parallel",)),
    )(x2d, wq, wk, wv, bq, bk, bv)


def kv_proj(x2d, wk, wv, bk, bv):
    M, K = x2d.shape
    N = wk.shape[1]
    tm = _row_tile(M)
    w_spec = pl.BlockSpec((K, N), lambda i: (0, 0))
    b_spec = pl.BlockSpec((1, N), lambda i: (0, 0))
    o_spec = pl.BlockSpec((tm, N), lambda i: (i, 0))
    return pl.pallas_call(
        _kv_kernel,
        out_shape=(jax.ShapeDtypeStruct((M, N), jnp.float32),) * 2,
        grid=(pl.cdiv(M, tm),),
        in_specs=[pl.BlockSpec((tm, K), lambda i: (i, 0)),
                  w_spec, w_spec, b_spec, b_spec],
        out_specs=(o_spec, o_spec),
        compiler_params=_cp(("parallel",)),
    )(x2d, wk, wv, bk, bv)


def out_proj_add_ln(ctx3, res3, w, b, g, beta):
    B, L, D = res3.shape
    M = B * L
    tm = _row_tile(M)
    row_spec = pl.BlockSpec((tm, D), lambda i: (i, 0))
    vec_spec = pl.BlockSpec((1, D), lambda i: (0, 0))
    out = pl.pallas_call(
        _out_ln_kernel,
        out_shape=jax.ShapeDtypeStruct((M, D), jnp.float32),
        grid=(pl.cdiv(M, tm),),
        in_specs=[row_spec, row_spec,
                  pl.BlockSpec((D, D), lambda i: (0, 0)),
                  vec_spec, vec_spec, vec_spec],
        out_specs=row_spec,
        compiler_params=_cp(("parallel",)),
    )(ctx3.reshape(M, D), res3.reshape(M, D), w, b, g, beta)
    return out.reshape(B, L, D)


def ffn_add_ln(x3d, w1, b1, w2, b2, g, beta):
    B, L, D = x3d.shape
    F = w1.shape[1]
    M = B * L
    tm = _row_tile(M)
    row_spec = pl.BlockSpec((tm, D), lambda i: (i, 0))
    out = pl.pallas_call(
        _ffn_ln_kernel,
        out_shape=jax.ShapeDtypeStruct((M, D), jnp.float32),
        grid=(pl.cdiv(M, tm),),
        in_specs=[row_spec,
                  pl.BlockSpec((D, F), lambda i: (0, 0)),
                  pl.BlockSpec((1, F), lambda i: (0, 0)),
                  pl.BlockSpec((F, D), lambda i: (0, 0)),
                  pl.BlockSpec((1, D), lambda i: (0, 0)),
                  pl.BlockSpec((1, D), lambda i: (0, 0)),
                  pl.BlockSpec((1, D), lambda i: (0, 0))],
        out_specs=row_spec,
        compiler_params=_cp(("parallel",)),
    )(x3d.reshape(M, D), w1, b1, w2, b2, g, beta)
    return out.reshape(B, L, D)


def attention_core(q3, k3, v3, mask_i8, n_heads, return_attn):
    """q3: (B,Lq,D), k3/v3: (B,Lk,D) f32, mask_i8: (B,Lq,Lk) int8."""
    B, Lq, D = q3.shape
    Lk = k3.shape[1]
    d_k = D // n_heads
    kernel = functools.partial(_mha_kernel, n_heads=n_heads, d_k=d_k)

    ctx_sds = jax.ShapeDtypeStruct((B, Lq, D), jnp.float32)
    ctx_spec = pl.BlockSpec((pl.Squeezed(), Lq, D), lambda i: (i, 0, 0))
    if return_attn:
        out_shape = (ctx_sds, jax.ShapeDtypeStruct((B, n_heads, Lq, Lk), jnp.float32))
        out_specs = (ctx_spec,
                     pl.BlockSpec((pl.Squeezed(), n_heads, Lq, Lk),
                                  lambda i: (i, 0, 0, 0)))
    else:
        out_shape = ctx_sds
        out_specs = ctx_spec

    res = pl.pallas_call(
        kernel,
        out_shape=out_shape,
        grid=(B,),
        in_specs=[pl.BlockSpec((pl.Squeezed(), Lq, D), lambda i: (i, 0, 0)),
                  pl.BlockSpec((pl.Squeezed(), Lk, D), lambda i: (i, 0, 0)),
                  pl.BlockSpec((pl.Squeezed(), Lk, D), lambda i: (i, 0, 0)),
                  pl.BlockSpec((pl.Squeezed(), Lq, Lk), lambda i: (i, 0, 0))],
        out_specs=out_specs,
        compiler_params=_cp(("parallel",)),
    )(q3, k3, v3, mask_i8)

    if return_attn:
        return res[0], res[1]
    return res, None


# ----------------------------------------------------------------------------
# Model glue (composition in plain JAX; no transposes between kernels)
# ----------------------------------------------------------------------------

def mha_self(p, x, mask_i8, n_heads, return_attn=False):
    B, L, D = x.shape
    q, k, v = qkv_proj(x.reshape(B * L, D), p["wq"], p["wk"], p["wv"],
                       p["bq"], p["bk"], p["bv"])
    return attention_core(q.reshape(B, L, D), k.reshape(B, L, D),
                          v.reshape(B, L, D), mask_i8, n_heads, return_attn)


def mha_cross(p, query, kv, mask_i8, n_heads, return_attn=True):
    B, Lq, D = query.shape
    Lk = kv.shape[1]
    q = linear(query.reshape(B * Lq, D), p["wq"], p["bq"]).reshape(B, Lq, D)
    k, v = kv_proj(kv.reshape(B * Lk, D), p["wk"], p["wv"], p["bk"], p["bv"])
    return attention_core(q, k.reshape(B, Lk, D), v.reshape(B, Lk, D),
                          mask_i8, n_heads, return_attn)


def encoder_layer(p, src, src_mask, n_heads):
    ctx, _ = mha_self(p["self_attn"], src, src_mask, n_heads, return_attn=False)
    src = out_proj_add_ln(ctx, src, p["self_attn"]["wo"], p["self_attn"]["bo"],
                          p["ln1_g"], p["ln1_b"])
    src = ffn_add_ln(src, p["ff_w1"], p["ff_b1"], p["ff_w2"], p["ff_b2"],
                     p["ln2_g"], p["ln2_b"])
    return src


def decoder_layer(p, trg, enc_src, trg_mask, src_mask, n_heads):
    ctx, _ = mha_self(p["self_attn"], trg, trg_mask, n_heads, return_attn=False)
    trg = out_proj_add_ln(ctx, trg, p["self_attn"]["wo"], p["self_attn"]["bo"],
                          p["ln1_g"], p["ln1_b"])
    ctx, attention = mha_cross(p["enc_attn"], trg, enc_src, src_mask, n_heads,
                               return_attn=True)
    trg = out_proj_add_ln(ctx, trg, p["enc_attn"]["wo"], p["enc_attn"]["bo"],
                          p["ln2_g"], p["ln2_b"])
    trg = ffn_add_ln(trg, p["ff_w1"], p["ff_b1"], p["ff_w2"], p["ff_b2"],
                     p["ln3_g"], p["ln3_b"])
    return trg, attention


def positional_encoding(max_len, d_model):
    pos = jnp.arange(max_len, dtype=jnp.float32)[:, None]
    div = jnp.exp(jnp.arange(0, d_model, 2, dtype=jnp.float32)
                  * (-math.log(10000.0) / d_model))
    pe = jnp.zeros((max_len, d_model), jnp.float32)
    pe = pe.at[:, 0::2].set(jnp.sin(pos * div))
    pe = pe.at[:, 1::2].set(jnp.cos(pos * div))
    return pe


def transformer_forward(params, src, trg, n_heads, pad_idx=1):
    d_model = params["enc_emb"].shape[1]
    scale = math.sqrt(d_model)
    B, Ls = src.shape
    Lt = trg.shape[1]

    # masks: per-batch int8 (no per-head / f32 broadcast materialized)
    src_valid = (src != pad_idx)                                         # (B, Ls)
    enc_self_mask = jnp.broadcast_to(src_valid[:, None, :], (B, Ls, Ls)).astype(jnp.int8)
    cross_mask = jnp.broadcast_to(src_valid[:, None, :], (B, Lt, Ls)).astype(jnp.int8)
    causal = jnp.tril(jnp.ones((Lt, Lt), dtype=jnp.bool_))
    trg_self_mask = ((trg != pad_idx)[:, None, :] & causal[None, :, :]).astype(jnp.int8)

    pe = params["pe"]

    # TODO(synk): embedding gather + positional-encoding add stay in plain JAX
    # (token-id gather has no clean BlockSpec form without manual DMA gather).
    x = params["enc_emb"][src] * scale + pe[None, :Ls]
    for lp in params["enc_layers"]:
        x = encoder_layer(lp, x, enc_self_mask, n_heads)
    enc_src = x

    y = params["dec_emb"][trg] * scale + pe[None, :Lt]
    attentions = []
    for lp in params["dec_layers"]:
        y, attention = decoder_layer(lp, y, enc_src, trg_self_mask, cross_mask, n_heads)
        attentions.append(attention)

    B_, L_, D_ = y.shape
    output = linear(y.reshape(B_ * L_, D_), params["fc_out_w"],
                    params["fc_out_b"]).reshape(B_, L_, -1)
    return output, attentions


# ----------------------------------------------------------------------------
# Deterministic parameter init.  Weights are stored PRE-TRANSPOSED (in, out)
# in bf16; biases / LayerNorm params as (1, out) f32.
# ----------------------------------------------------------------------------

def _init_linear(key, in_dim, out_dim):
    k1, k2 = jax.random.split(key)
    bound = 1.0 / math.sqrt(in_dim)
    w = jax.random.uniform(k1, (in_dim, out_dim), jnp.float32,
                           -bound, bound).astype(jnp.bfloat16)
    b = jax.random.uniform(k2, (1, out_dim), jnp.float32, -bound, bound)
    return w, b


def _init_mha(key, d_model):
    ks = jax.random.split(key, 4)
    wq, bq = _init_linear(ks[0], d_model, d_model)
    wk, bk = _init_linear(ks[1], d_model, d_model)
    wv, bv = _init_linear(ks[2], d_model, d_model)
    wo, bo = _init_linear(ks[3], d_model, d_model)
    return dict(wq=wq, bq=bq, wk=wk, bk=bk, wv=wv, bv=bv, wo=wo, bo=bo)


def _ln(d):
    return jnp.ones((1, d), jnp.float32), jnp.zeros((1, d), jnp.float32)


def _init_enc_layer(key, d_model, d_ff):
    ks = jax.random.split(key, 3)
    w1, b1 = _init_linear(ks[1], d_model, d_ff)
    w2, b2 = _init_linear(ks[2], d_ff, d_model)
    g1, bb1 = _ln(d_model)
    g2, bb2 = _ln(d_model)
    return dict(self_attn=_init_mha(ks[0], d_model),
                ln1_g=g1, ln1_b=bb1, ln2_g=g2, ln2_b=bb2,
                ff_w1=w1, ff_b1=b1, ff_w2=w2, ff_b2=b2)


def _init_dec_layer(key, d_model, d_ff):
    ks = jax.random.split(key, 4)
    w1, b1 = _init_linear(ks[2], d_model, d_ff)
    w2, b2 = _init_linear(ks[3], d_ff, d_model)
    g1, bb1 = _ln(d_model)
    g2, bb2 = _ln(d_model)
    g3, bb3 = _ln(d_model)
    return dict(self_attn=_init_mha(ks[0], d_model),
                enc_attn=_init_mha(ks[1], d_model),
                ln1_g=g1, ln1_b=bb1, ln2_g=g2, ln2_b=bb2, ln3_g=g3, ln3_b=bb3,
                ff_w1=w1, ff_b1=b1, ff_w2=w2, ff_b2=b2)


def init_transformer(key, src_vocab, tgt_vocab, d_model, n_layers, d_ff, max_len=100):
    ks = jax.random.split(key, 4 + 2 * n_layers)
    enc_emb = jax.random.normal(ks[0], (src_vocab, d_model), jnp.float32)
    dec_emb = jax.random.normal(ks[1], (tgt_vocab, d_model), jnp.float32)
    fc_out_w, fc_out_b = _init_linear(ks[2], d_model, tgt_vocab)
    enc_layers = [_init_enc_layer(ks[4 + i], d_model, d_ff) for i in range(n_layers)]
    dec_layers = [_init_dec_layer(ks[4 + n_layers + i], d_model, d_ff)
                  for i in range(n_layers)]
    return dict(enc_emb=enc_emb, dec_emb=dec_emb,
                pe=positional_encoding(max_len, d_model),
                enc_layers=enc_layers, dec_layers=dec_layers,
                fc_out_w=fc_out_w, fc_out_b=fc_out_b)


# ----------------------------------------------------------------------------

if __name__ == "__main__":
    SRC_VOCAB, TGT_VOCAB = 20, 20
    D_MODEL, N_LAYERS, N_HEADS, D_FF = 32, 2, 4, 64
    B, SRC_LEN, TRG_LEN = 2, 8, 8

    key = jax.random.PRNGKey(0)
    kp, ks, kt = jax.random.split(key, 3)

    params = init_transformer(kp, SRC_VOCAB, TGT_VOCAB, D_MODEL, N_LAYERS, D_FF)

    src = jax.random.randint(ks, (B, SRC_LEN), 0, SRC_VOCAB)
    trg = jax.random.randint(kt, (B, TRG_LEN), 0, TGT_VOCAB)
    # force some pad tokens (pad_idx=1) so masking is exercised
    src = src.at[0, -1].set(1)
    trg = trg.at[1, -1].set(1)

    output, attentions = transformer_forward(params, src, trg, N_HEADS)
    jax.block_until_ready(output)
    for a in attentions:
        jax.block_until_ready(a)

    assert output.shape == (B, TRG_LEN, TGT_VOCAB)
    assert attentions[-1].shape == (B, N_HEADS, TRG_LEN, SRC_LEN)
    print("KERNEL_OK")
</pallas_src>

<mosaic_0001>
module attributes {stable_mosaic.version = 11 : i64} {
  func.func @_qkv_kernel(%arg0: i32, %arg1: memref<16x32xf32, #tpu.memory_space<vmem>>, %arg2: memref<32x32xbf16, #tpu.memory_space<vmem>>, %arg3: memref<32x32xbf16, #tpu.memory_space<vmem>>, %arg4: memref<32x32xbf16, #tpu.memory_space<vmem>>, %arg5: memref<1x32xf32, #tpu.memory_space<vmem>>, %arg6: memref<1x32xf32, #tpu.memory_space<vmem>>, %arg7: memref<1x32xf32, #tpu.memory_space<vmem>>, %arg8: memref<16x32xf32, #tpu.memory_space<vmem>>, %arg9: memref<16x32xf32, #tpu.memory_space<vmem>>, %arg10: memref<16x32xf32, #tpu.memory_space<vmem>>) attributes {dimension_semantics = [#tpu.dimension_semantics<parallel>], iteration_bounds = array<i64: 1>, scalar_prefetch = 0 : i64, scratch_operands = 0 : i64, tpu.core_type = #tpu.core_type<tc>, window_params = [{transform_indices = @transform_0, window_bounds = array<i64: 16, 32>}, {pipeline_mode = #tpu.pipeline_mode<synchronous>, transform_indices = @transform_1, window_bounds = array<i64: 32, 32>}, {pipeline_mode = #tpu.pipeline_mode<synchronous>, transform_indices = @transform_2, window_bounds = array<i64: 32, 32>}, {pipeline_mode = #tpu.pipeline_mode<synchronous>, transform_indices = @transform_3, window_bounds = array<i64: 32, 32>}, {pipeline_mode = #tpu.pipeline_mode<synchronous>, transform_indices = @transform_4, window_bounds = array<i64: 1, 32>}, {pipeline_mode = #tpu.pipeline_mode<synchronous>, transform_indices = @transform_5, window_bounds = array<i64: 1, 32>}, {pipeline_mode = #tpu.pipeline_mode<synchronous>, transform_indices = @transform_6, window_bounds = array<i64: 1, 32>}, {transform_indices = @transform_7, window_bounds = array<i64: 16, 32>}, {transform_indices = @transform_8, window_bounds = array<i64: 16, 32>}, {transform_indices = @transform_9, window_bounds = array<i64: 16, 32>}]} {
    %c0 = arith.constant 0 : index
    %c0_0 = arith.constant 0 : index
    %0 = vector.load %arg1[%c0, %c0_0] : memref<16x32xf32, #tpu.memory_space<vmem>>, vector<16x32xf32>
    %1 = arith.truncf %0 : vector<16x32xf32> to vector<16x32xbf16>
    %c0_1 = arith.constant 0 : index
    %c0_2 = arith.constant 0 : index
    %2 = vector.load %arg2[%c0_1, %c0_2] : memref<32x32xbf16, #tpu.memory_space<vmem>>, vector<32x32xbf16>
    %cst = arith.constant dense<0.000000e+00> : vector<16x32xf32>
    %3 = tpu.matmul %1, %2, %cst {dimension_numbers = #tpu.dot_dimension_numbers<[1], [0], [0], [1], [0, 0, 1, 1], [], []>} : vector<16x32xbf16>, vector<32x32xbf16>, vector<16x32xf32> -> vector<16x32xf32>
    %c0_3 = arith.constant 0 : index
    %c0_4 = arith.constant 0 : index
    %4 = vector.load %arg5[%c0_3, %c0_4] : memref<1x32xf32, #tpu.memory_space<vmem>>, vector<1x32xf32>
    %5 = vector.broadcast %4 : vector<1x32xf32> to vector<16x32xf32>
    %6 = arith.addf %3, %5 : vector<16x32xf32>
    %c0_5 = arith.constant 0 : index
    %c0_6 = arith.constant 0 : index
    %7 = vector.load %arg8[%c0_5, %c0_6] : memref<16x32xf32, #tpu.memory_space<vmem>>, vector<16x32xf32>
    tpu.vector_store %arg8[%c0_5, %c0_6], %6 {strides = array<i32>} : memref<16x32xf32, #tpu.memory_space<vmem>>, vector<16x32xf32>,
    %c0_7 = arith.constant 0 : index
    %c0_8 = arith.constant 0 : index
    %8 = vector.load %arg3[%c0_7, %c0_8] : memref<32x32xbf16, #tpu.memory_space<vmem>>, vector<32x32xbf16>
    %cst_9 = arith.constant dense<0.000000e+00> : vector<16x32xf32>
    %9 = tpu.matmul %1, %8, %cst_9 {dimension_numbers = #tpu.dot_dimension_numbers<[1], [0], [0], [1], [0, 0, 1, 1], [], []>} : vector<16x32xbf16>, vector<32x32xbf16>, vector<16x32xf32> -> vector<16x32xf32>
    %c0_10 = arith.constant 0 : index
    %c0_11 = arith.constant 0 : index
    %10 = vector.load %arg6[%c0_10, %c0_11] : memref<1x32xf32, #tpu.memory_space<vmem>>, vector<1x32xf32>
    %11 = vector.broadcast %10 : vector<1x32xf32> to vector<16x32xf32>
    %12 = arith.addf %9, %11 : vector<16x32xf32>
    %c0_12 = arith.constant 0 : index
    %c0_13 = arith.constant 0 : index
    %13 = vector.load %arg9[%c0_12, %c0_13] : memref<16x32xf32, #tpu.memory_space<vmem>>, vector<16x32xf32>
    tpu.vector_store %arg9[%c0_12, %c0_13], %12 {strides = array<i32>} : memref<16x32xf32, #tpu.memory_space<vmem>>, vector<16x32xf32>,
    %c0_14 = arith.constant 0 : index
    %c0_15 = arith.constant 0 : index
    %14 = vector.load %arg4[%c0_14, %c0_15] : memref<32x32xbf16, #tpu.memory_space<vmem>>, vector<32x32xbf16>
    %cst_16 = arith.constant dense<0.000000e+00> : vector<16x32xf32>
    %15 = tpu.matmul %1, %14, %cst_16 {dimension_numbers = #tpu.dot_dimension_numbers<[1], [0], [0], [1], [0, 0, 1, 1], [], []>} : vector<16x32xbf16>, vector<32x32xbf16>, vector<16x32xf32> -> vector<16x32xf32>
    %c0_17 = arith.constant 0 : index
    %c0_18 = arith.constant 0 : index
    %16 = vector.load %arg7[%c0_17, %c0_18] : memref<1x32xf32, #tpu.memory_space<vmem>>, vector<1x32xf32>
    %17 = vector.broadcast %16 : vector<1x32xf32> to vector<16x32xf32>
    %18 = arith.addf %15, %17 : vector<16x32xf32>
    %c0_19 = arith.constant 0 : index
    %c0_20 = arith.constant 0 : index
    %19 = vector.load %arg10[%c0_19, %c0_20] : memref<16x32xf32, #tpu.memory_space<vmem>>, vector<16x32xf32>
    tpu.vector_store %arg10[%c0_19, %c0_20], %18 {strides = array<i32>} : memref<16x32xf32, #tpu.memory_space<vmem>>, vector<16x32xf32>,
    return
  }
  func.func @transform_0(%arg0: i32) -> (i32, i32) {
    %c0_i32 = arith.constant 0 : i32
    %c0_i32_0 = arith.constant 0 : i32
    return %arg0, %c0_i32 : i32, i32
  }
  func.func @transform_1(%arg0: i32) -> (i32, i32) {
    %c0_i32 = arith.constant 0 : i32
    %c0_i32_0 = arith.constant 0 : i32
    %c0_i32_1 = arith.constant 0 : i32
    return %c0_i32, %c0_i32_0 : i32, i32
  }
  func.func @transform_2(%arg0: i32) -> (i32, i32) {
    %c0_i32 = arith.constant 0 : i32
    %c0_i32_0 = arith.constant 0 : i32
    %c0_i32_1 = arith.constant 0 : i32
    return %c0_i32, %c0_i32_0 : i32, i32
  }
  func.func @transform_3(%arg0: i32) -> (i32, i32) {
    %c0_i32 = arith.constant 0 : i32
    %c0_i32_0 = arith.constant 0 : i32
    %c0_i32_1 = arith.constant 0 : i32
    return %c0_i32, %c0_i32_0 : i32, i32
  }
  func.func @transform_4(%arg0: i32) -> (i32, i32) {
    %c0_i32 = arith.constant 0 : i32
    %c0_i32_0 = arith.constant 0 : i32
    %c0_i32_1 = arith.constant 0 : i32
    return %c0_i32, %c0_i32_0 : i32, i32
  }
  func.func @transform_5(%arg0: i32) -> (i32, i32) {
    %c0_i32 = arith.constant 0 : i32
    %c0_i32_0 = arith.constant 0 : i32
    %c0_i32_1 = arith.constant 0 : i32
    return %c0_i32, %c0_i32_0 : i32, i32
  }
  func.func @transform_6(%arg0: i32) -> (i32, i32) {
    %c0_i32 = arith.constant 0 : i32
    %c0_i32_0 = arith.constant 0 : i32
    %c0_i32_1 = arith.constant 0 : i32
    return %c0_i32, %c0_i32_0 : i32, i32
  }
  func.func @transform_7(%arg0: i32) -> (i32, i32) {
    %c0_i32 = arith.constant 0 : i32
    %c0_i32_0 = arith.constant 0 : i32
    return %arg0, %c0_i32 : i32, i32
  }
  func.func @transform_8(%arg0: i32) -> (i32, i32) {
    %c0_i32 = arith.constant 0 : i32
    %c0_i32_0 = arith.constant 0 : i32
    return %arg0, %c0_i32 : i32, i32
  }
  func.func @transform_9(%arg0: i32) -> (i32, i32) {
    %c0_i32 = arith.constant 0 : i32
    %c0_i32_0 = arith.constant 0 : i32
    return %arg0, %c0_i32 : i32, i32
  }
}

</mosaic_0001>

<llo_original>
// kernel: tpu_custom_call.1
$region0: #{tpu_custom_call.1}
  #allocation0 [shape = 'u32[]', space=smem, size = 0x4, offset = 0x4, fixed_abs, tag = 'smem constant byte address 0x4 - core index']
  #allocation1 [shape = 'u32[72,128]{1,0:T(1,128)}', space=vmem, size = 0x9000, scoped, tag = 'internal scratch']
  %s0 = inlined_call_operand.hbm [shape: f32[16,32], index: 0, kind: input, shape index: {}]
  %s1 = inlined_call_operand.hbm [shape: bf16[32,32], index: 1, kind: input, shape index: {}]
  %s2 = inlined_call_operand.hbm [shape: bf16[32,32], index: 2, kind: input, shape index: {}]
  %s3 = inlined_call_operand.hbm [shape: bf16[32,32], index: 3, kind: input, shape index: {}]
  %s4 = inlined_call_operand.vmem [shape: f32[1,32], index: 4, kind: input, shape index: {}]
  %s5 = inlined_call_operand.vmem [shape: f32[1,32], index: 5, kind: input, shape index: {}]
  %s6 = inlined_call_operand.vmem [shape: f32[1,32], index: 6, kind: input, shape index: {}]
  %s7 = inlined_call_operand.hbm [shape: f32[16,32], index: 7, kind: output, shape index: {0}]
  %s8 = inlined_call_operand.hbm [shape: f32[16,32], index: 8, kind: output, shape index: {1}]
  %s9 = inlined_call_operand.hbm [shape: f32[16,32], index: 9, kind: output, shape index: {2}]
  %10 = xla_tuple %s7, %s8, %s9
  %s11 = sld [smem:[#allocation0]]
  $region70: #{tpu_custom_call.1} parent=0
    _
  %s13 = ssub.s32 1, %s11
  %s14 = scalar_select 0, %s13, %s11
  $region1: #{tpu_custom_call.1} parent=0
    #allocation2 [shape = 'u8[8192]{0}', space=vmem, size = 0x2000, scoped, tag = 'input window, operand 0, single buffered']
    #allocation3 [shape = 's32[1]{0}', space=sflag, size = 0x4, scoped, tag = 'scoped memory for tpu_custom_call.1']
    #allocation4 [shape = 's32[1]{0}', space=sflag, size = 0x4, scoped, tag = 'scoped memory for tpu_custom_call.1']
    #allocation5 [shape = 'u8[8192]{0}', space=vmem, size = 0x2000, scoped, tag = 'input window, operand 1, single buffered']
    #allocation6 [shape = 's32[1]{0}', space=sflag, size = 0x4, scoped, tag = 'scoped memory for tpu_custom_call.1']
    #allocation7 [shape = 'u8[8192]{0}', space=vmem, size = 0x2000, scoped, tag = 'input window, operand 2, single buffered']
    #allocation8 [shape = 'u8[8192]{0}', space=vmem, size = 0x2000, scoped, tag = 'input window, operand 3, single buffered']
    #allocation9 [shape = 's32[1]{0}', space=sflag, size = 0x4, scoped, tag = 'scoped memory for tpu_custom_call.1']
    #allocation10 [shape = 'u8[8192]{0}', space=vmem, size = 0x2000, scoped, tag = 'output window, operand 0, single buffered']
    #allocation11 [shape = 'u8[8192]{0}', space=vmem, size = 0x2000, scoped, tag = 'output window, operand 1, single buffered']
    #allocation12 [shape = 's32[1]{0}', space=sflag, size = 0x4, scoped, tag = 'scoped memory for tpu_custom_call.1']
    #allocation13 [shape = 'u8[8192]{0}', space=vmem, size = 0x2000, scoped, tag = 'output window, operand 2, single buffered']
    %15 = vsyncpa [#allocation3], 0
    %16 = vsyncpa [#allocation6], 0
    %17 = vsyncpa [#allocation9], 0
    %18 = vsyncpa [#allocation4], 0
    %19 = vsyncpa [#allocation12], 0
    // Predicated region
    $region2: #{tpu_custom_call.1} parent=1 // pred_check
      _
    $region3: #{tpu_custom_call.1} parent=1 // pred_check_branch
      %21 = sbr.rel (0) target = $region5
    $region4: #{tpu_custom_call.1} parent=1 // pred_region
      %23 = vsyncadd [#allocation3], 0
      %s24 = sshll.u32 %s0, 4
      %s25 = int_to_ptr.hbm [resolvable:$true] %s24
      %s26 = sshll.u32 [#allocation2], 4
      %s27 = int_to_ptr.vmem [resolvable:$true] %s26
      %32 = dma.hbm_to_vmem [thread:$0]  %s25, 256, %s27, [#allocation3], 128, 128, 8
    $region5: #{tpu_custom_call.1} parent=1 // pred_fallthru
      _
    // Predicated region
    $region6: #{tpu_custom_call.1} parent=1 // pred_check
      _
    $region7: #{tpu_custom_call.1} parent=1 // pred_check_branch
      %34 = sbr.rel (0) target = $region9
    $region8: #{tpu_custom_call.1} parent=1 // pred_region
      %36 = vsyncadd [#allocation6], 0
      %s37 = sshll.u32 %s1, 4
      %s38 = int_to_ptr.hbm [resolvable:$true] %s37
      %s39 = sshll.u32 [#allocation5], 4
      %s40 = int_to_ptr.vmem [resolvable:$true] %s39
      %45 = dma.hbm_to_vmem [thread:$0]  %s38, 256, %s40, [#allocation6], 64, 64, 4
    $region9: #{tpu_custom_call.1} parent=1 // pred_fallthru
      _
    // Predicated region
    $region10: #{tpu_custom_call.1} parent=1 // pred_check
      _
    $region11: #{tpu_custom_call.1} parent=1 // pred_check_branch
      %47 = sbr.rel (0) target = $region13
    $region12: #{tpu_custom_call.1} parent=1 // pred_region
      %49 = vsyncadd [#allocation6], 0
      %s50 = sshll.u32 %s2, 4
      %s51 = int_to_ptr.hbm [resolvable:$true] %s50
      %s52 = sshll.u32 [#allocation7], 4
      %s53 = int_to_ptr.vmem [resolvable:$true] %s52
      %58 = dma.hbm_to_vmem [thread:$0]  %s51, 256, %s53, [#allocation6], 64, 64, 4
    $region13: #{tpu_custom_call.1} parent=1 // pred_fallthru
      _
    // Predicated region
    $region14: #{tpu_custom_call.1} parent=1 // pred_check
      _
    $region15: #{tpu_custom_call.1} parent=1 // pred_check_branch
      %60 = sbr.rel (0) target = $region17
    $region16: #{tpu_custom_call.1} parent=1 // pred_region
      %62 = vsyncadd [#allocation9], 0
      %s63 = sshll.u32 %s3, 4
      %s64 = int_to_ptr.hbm [resolvable:$true] %s63
      %s65 = sshll.u32 [#allocation8], 4
      %s66 = int_to_ptr.vmem [resolvable:$true] %s65
      %71 = dma.hbm_to_vmem [thread:$0]  %s64, 256, %s66, [#allocation9], 64, 64, 4
    $region17: #{tpu_custom_call.1} parent=1 // pred_fallthru
      _
    // Predicated region
    $region18: #{tpu_custom_call.1} parent=1 // pred_check
      _
    $region19: #{tpu_custom_call.1} parent=1 // pred_check_branch
      %73 = sbr.rel (0) target = $region21
    $region20: #{tpu_custom_call.1} parent=1 // pred_region
      _
    $region21: #{tpu_custom_call.1} parent=1 // pred_fallthru
      _
    // Predicated region
    $region22: #{tpu_custom_call.1} parent=1 // pred_check
      _
    $region23: #{tpu_custom_call.1} parent=1 // pred_check_branch
      %75 = sbr.rel (0) target = $region25
    $region24: #{tpu_custom_call.1} parent=1 // pred_region
      _
    $region25: #{tpu_custom_call.1} parent=1 // pred_fallthru
      _
    // Predicated region
    $region26: #{tpu_custom_call.1} parent=1 // pred_check
      _
    $region27: #{tpu_custom_call.1} parent=1 // pred_check_branch
      %77 = sbr.rel (0) target = $region29
    $region28: #{tpu_custom_call.1} parent=1 // pred_region
      _
    $region29: #{tpu_custom_call.1} parent=1 // pred_fallthru
      _
    // Predicated region
    $region30: #{tpu_custom_call.1} parent=1 // pred_check
      _
    $region31: #{tpu_custom_call.1} parent=1 // pred_check_branch
      %79 = sbr.rel (0) target = $region33
    $region32: #{tpu_custom_call.1} parent=1 // pred_region
      %81 = dma.done [#allocation3], 256
    $region33: #{tpu_custom_call.1} parent=1 // pred_fallthru
      _
    // Predicated region
    $region34: #{tpu_custom_call.1} parent=1 // pred_check
      _
    $region35: #{tpu_custom_call.1} parent=1 // pred_check_branch
      %83 = sbr.rel (0) target = $region37
    $region36: #{tpu_custom_call.1} parent=1 // pred_region
      %85 = dma.done [#allocation6], 256
    $region37: #{tpu_custom_call.1} parent=1 // pred_fallthru
      _
    // Predicated region
    $region38: #{tpu_custom_call.1} parent=1 // pred_check
      _
    $region39: #{tpu_custom_call.1} parent=1 // pred_check_branch
      %87 = sbr.rel (0) target = $region41
    $region40: #{tpu_custom_call.1} parent=1 // pred_region
      %89 = dma.done [#allocation6], 256
    $region41: #{tpu_custom_call.1} parent=1 // pred_fallthru
      _
    // Predicated region
    $region42: #{tpu_custom_call.1} parent=1 // pred_check
      _
    $region43: #{tpu_custom_call.1} parent=1 // pred_check_branch
      %91 = sbr.rel (0) target = $region45
    $region44: #{tpu_custom_call.1} parent=1 // pred_region
      %93 = dma.done [#allocation9], 256
    $region45: #{tpu_custom_call.1} parent=1 // pred_fallthru
      _
    %v95 = vld [vmem:[#allocation2] sm:$0xff]
    %v96 = vld [vmem:[#allocation2 + $0x8] sm:$0xff]
    %v97 = vpack.c.bf16 %v96, %v95
    %v98 = vld [vmem:[#allocation5] sm:$0xf]
    %v99 = vld [vmem:[#allocation5 + $0x4] sm:$0xf]
    %v100 = vld [vmem:[#allocation5 + $0x8] sm:$0xf]
    %v101 = vld [vmem:[#allocation5 + $0xc] sm:$0xf]
    %v102 = vld [vmem:[%s4] sm:$0x1]
    %v104 = vperm.slane %v102, 0
    %v110 = vunpack.c.l.b16 %v98
    %v111 = vunpack.c.l.b16 %v99
    %v112 = vunpack.c.l.b16 %v100
    %v113 = vunpack.c.l.b16 %v101
    %v114 = vpack.c.b16 %v111, %v110
    %v115 = vpack.c.b16 %v113, %v112
    %vm118 = vcmask 261120
    %v120 = vsel %vm118, %v97, 0
    %122 = vmatpush.bf16.msra.mxu0 0
    %123 = vmatpush.bf16.msra.mxu0 0
    %124 = vmatpush.bf16.msra.mxu0 0
    %125 = vmatpush.bf16.msra.mxu0 0
    %126 = vmatpush.bf16.msra.mxu0 0
    %127 = vmatpush.bf16.msra.mxu0 0
    %128 = vmatpush.bf16.msra.mxu0 %v115
    %129 = vmatpush.bf16.msra.mxu0 %v114
    %130 = vmatmul.bf16.gmra.mxu0 %v120
    %v131 = vpop.f32.mrf.mxu0
    %v132 = vadd.f32 %v104, %v131
    %v133 = vpop.f32.mrf.mxu0
    %v134 = vadd.f32 %v104, %v133
    %135 = vdwg.mxu0
    %136 = vst.msk [vmem:[#allocation10] sm:$0xff] %vm118, %v132
    %137 = vst.msk [vmem:[#allocation10 + $0x8] sm:$0xff] %vm118, %v134
    %v138 = vld [vmem:[#allocation7] sm:$0xf]
    %v139 = vld [vmem:[#allocation7 + $0x4] sm:$0xf]
    %v140 = vld [vmem:[#allocation7 + $0x8] sm:$0xf]
    %v141 = vld [vmem:[#allocation7 + $0xc] sm:$0xf]
    %v142 = vld [vmem:[%s5] sm:$0x1]
    %v144 = vperm.slane %v142, 0
    %v150 = vunpack.c.l.b16 %v138
    %v151 = vunpack.c.l.b16 %v139
    %v152 = vunpack.c.l.b16 %v140
    %v153 = vunpack.c.l.b16 %v141
    %v154 = vpack.c.b16 %v151, %v150
    %v155 = vpack.c.b16 %v153, %v152
    %158 = vmatpush.bf16.msra.mxu0 0
    %159 = vmatpush.bf16.msra.mxu0 0
    %160 = vmatpush.bf16.msra.mxu0 0
    %161 = vmatpush.bf16.msra.mxu0 0
    %162 = vmatpush.bf16.msra.mxu0 0
    %163 = vmatpush.bf16.msra.mxu0 0
    %164 = vmatpush.bf16.msra.mxu0 %v155
    %165 = vmatpush.bf16.msra.mxu0 %v154
    %166 = vmatmul.bf16.gmra.mxu0 %v120
    %v167 = vpop.f32.mrf.mxu0
    %v168 = vadd.f32 %v144, %v167
    %v169 = vpop.f32.mrf.mxu0
    %v170 = vadd.f32 %v144, %v169
    %171 = vdwg.mxu0
    %172 = vst.msk [vmem:[#allocation11] sm:$0xff] %vm118, %v168
    %173 = vst.msk [vmem:[#allocation11 + $0x8] sm:$0xff] %vm118, %v170
    %v174 = vld [vmem:[#allocation8] sm:$0xf]
    %v175 = vld [vmem:[#allocation8 + $0x4] sm:$0xf]
    %v176 = vld [vmem:[#allocation8 + $0x8] sm:$0xf]
    %v177 = vld [vmem:[#allocation8 + $0xc] sm:$0xf]
    %v178 = vld [vmem:[%s6] sm:$0x1]
    %v180 = vperm.slane %v178, 0
    %v186 = vunpack.c.l.b16 %v174
    %v187 = vunpack.c.l.b16 %v175
    %v188 = vunpack.c.l.b16 %v176
    %v189 = vunpack.c.l.b16 %v177
    %v190 = vpack.c.b16 %v187, %v186
    %v191 = vpack.c.b16 %v189, %v188
    %194 = vmatpush.bf16.msra.mxu0 0
    %195 = vmatpush.bf16.msra.mxu0 0
    %196 = vmatpush.bf16.msra.mxu0 0
    %197 = vmatpush.bf16.msra.mxu0 0
    %198 = vmatpush.bf16.msra.mxu0 0
    %199 = vmatpush.bf16.msra.mxu0 0
    %200 = vmatpush.bf16.msra.mxu0 %v191
    %201 = vmatpush.bf16.msra.mxu0 %v190
    %202 = vmatmul.bf16.gmra.mxu0 %v120
    %v203 = vpop.f32.mrf.mxu0
    %v204 = vadd.f32 %v180, %v203
    %v205 = vpop.f32.mrf.mxu0
    %v206 = vadd.f32 %v180, %v205
    %207 = vdwg.mxu0
    %208 = vst.msk [vmem:[#allocation13] sm:$0xff] %vm118, %v204
    %209 = vst.msk [vmem:[#allocation13 + $0x8] sm:$0xff] %vm118, %v206
    // Predicated region
    $region46: #{tpu_custom_call.1} parent=1 // pred_check
      _
    $region47: #{tpu_custom_call.1} parent=1 // pred_check_branch
      %211 = sbr.rel (0) target = $region49
    $region48: #{tpu_custom_call.1} parent=1 // pred_region
      %213 = vsyncadd [#allocation4], 0
      %s214 = sshll.u32 [#allocation10], 4
      %s215 = int_to_ptr.vmem [resolvable:$true] %s214
      %s216 = sshll.u32 %s7, 4
      %s217 = int_to_ptr.hbm [resolvable:$true] %s216
      %222 = dma.vmem_to_hbm [thread:$0]  %s215, 256, %s217, [#allocation4], 128, 128, 8
    $region49: #{tpu_custom_call.1} parent=1 // pred_fallthru
      _
    // Predicated region
    $region50: #{tpu_custom_call.1} parent=1 // pred_check
      _
    $region51: #{tpu_custom_call.1} parent=1 // pred_check_branch
      %224 = sbr.rel (0) target = $region53
    $region52: #{tpu_custom_call.1} parent=1 // pred_region
      %226 = vsyncadd [#allocation12], 0
      %s227 = sshll.u32 [#allocation11], 4
      %s228 = int_to_ptr.vmem [resolvable:$true] %s227
      %s229 = sshll.u32 %s8, 4
      %s230 = int_to_ptr.hbm [resolvable:$true] %s229
      %235 = dma.vmem_to_hbm [thread:$0]  %s228, 256, %s230, [#allocation12], 128, 128, 8
    $region53: #{tpu_custom_call.1} parent=1 // pred_fallthru
      _
    // Predicated region
    $region54: #{tpu_custom_call.1} parent=1 // pred_check
      _
    $region55: #{tpu_custom_call.1} parent=1 // pred_check_branch
      %237 = sbr.rel (0) target = $region57
    $region56: #{tpu_custom_call.1} parent=1 // pred_region
      %239 = vsyncadd [#allocation12], 0
      %s240 = sshll.u32 [#allocation13], 4
      %s241 = int_to_ptr.vmem [resolvable:$true] %s240
      %s242 = sshll.u32 %s9, 4
      %s243 = int_to_ptr.hbm [resolvable:$true] %s242
      %248 = dma.vmem_to_hbm [thread:$0]  %s241, 256, %s243, [#allocation12], 128, 128, 8
    $region57: #{tpu_custom_call.1} parent=1 // pred_fallthru
      _
    // Predicated region
    $region58: #{tpu_custom_call.1} parent=1 // pred_check
      _
    $region59: #{tpu_custom_call.1} parent=1 // pred_check_branch
      %250 = sbr.rel (0) target = $region61
    $region60: #{tpu_custom_call.1} parent=1 // pred_region
      %252 = dma.done [#allocation4], 256
    $region61: #{tpu_custom_call.1} parent=1 // pred_fallthru
      _
    // Predicated region
    $region62: #{tpu_custom_call.1} parent=1 // pred_check
      _
    $region63: #{tpu_custom_call.1} parent=1 // pred_check_branch
      %254 = sbr.rel (0) target = $region65
    $region64: #{tpu_custom_call.1} parent=1 // pred_region
      %256 = dma.done [#allocation12], 256
    $region65: #{tpu_custom_call.1} parent=1 // pred_fallthru
      _
    // Predicated region
    $region66: #{tpu_custom_call.1} parent=1 // pred_check
      _
    $region67: #{tpu_custom_call.1} parent=1 // pred_check_branch
      %258 = sbr.rel (0) target = $region69
    $region68: #{tpu_custom_call.1} parent=1 // pred_region
      %260 = dma.done [#allocation12], 256
    $region69: #{tpu_custom_call.1} parent=1 // pred_fallthru
      _
    %261 = vsyncpa [#allocation3], 1
    %262 = vsyncpa [#allocation6], 1
    %263 = vsyncpa [#allocation9], 1
    %264 = vsyncpa [#allocation4], 1
    %265 = vsyncpa [#allocation12], 1

</llo_original>
